<compile_context>
chip_gen: v7x
topology: tpu7x:2x2x1
jax: 0.10.0
libtpu: 0.0.40
codegen_flags: <defaults>
</compile_context>

<pallas_src>
import functools

import numpy as np
import jax
import jax.numpy as jnp
from jax import lax
from jax.experimental import pallas as pl
from jax.experimental.pallas import tpu as pltpu


def _vdn_kernel(x_ref, r_ref, o_ref, *, sigma):
    x = x_ref[...].astype(jnp.float32)
    r = r_ref[...].astype(jnp.float32)

    # ||x||_2 along the last (lane) dim, keepdim.  Needed as a value, so keep
    # the sqrt exact here.
    norm = jnp.sqrt(jnp.sum(x * x, axis=-1, keepdims=True))

    # rand = sigma * norm * r / ||r||_2   (rsqrt -> EUP slot, cheap)
    rand = (sigma * norm) * r * lax.rsqrt(jnp.sum(r * r, axis=-1, keepdims=True))

    # y = x + rand ; renormalize back to the original norm.
    y = x + rand
    out = (norm * lax.rsqrt(jnp.sum(y * y, axis=-1, keepdims=True))) * y

    o_ref[...] = out.astype(o_ref.dtype)


def _choose_tile_rows(rows, hidden):
    """Largest multiple-of-8 row tile whose f32 block stays ~1 MiB."""
    target_block_bytes = 1 << 20           # ~1 MiB per block per array
    bytes_per_row = hidden * 4              # f32 worst case (r + temporaries)
    tile_rows = max(8, (target_block_bytes // max(bytes_per_row, 1)) // 8 * 8)
    rows_up8 = -(-rows // 8) * 8
    return int(min(tile_rows, rows_up8))


def vector_displacement_noise(x, *, sigma=0.1, training=True, key=None):
    """JAX/Pallas equivalent of VectorDisplacementNoise.forward."""
    if (not training) or sigma == 0:
        return x
    if key is None:
        key = jax.random.PRNGKey(0)

    orig_shape = x.shape
    hidden = int(orig_shape[-1])
    rows = int(np.prod(orig_shape[:-1])) if len(orig_shape) > 1 else 1
    x2 = x.reshape(rows, hidden)

    tile_rows = _choose_tile_rows(rows, hidden)
    rows_pad = -(-rows // tile_rows) * tile_rows
    if rows_pad != rows:
        # Padded rows are all-zero; their (NaN) outputs are sliced off below.
        x2 = jnp.pad(x2, ((0, rows_pad - rows), (0, 0)))

    # Uniform [0,1) noise (torch.rand analogue), generated at the padded shape.
    r = jax.random.uniform(key, (rows_pad, hidden), dtype=jnp.float32)

    grid = (rows_pad // tile_rows,)

    # TODO(synk): for hidden < 128, a lane-dense packed layout (G = 128 // hidden
    # vectors per 128-lane row with segmented reductions) would avoid masked
    # partial stores; real model dims (multiples of 128) already hit the fast path.
    out = pl.pallas_call(
        functools.partial(_vdn_kernel, sigma=float(sigma)),
        out_shape=jax.ShapeDtypeStruct((rows_pad, hidden), x.dtype),
        grid_spec=pltpu.PrefetchScalarGridSpec(
            num_scalar_prefetch=0,
            grid=grid,
            in_specs=[
                pl.BlockSpec((tile_rows, hidden), lambda i: (i, 0)),
                pl.BlockSpec((tile_rows, hidden), lambda i: (i, 0)),
            ],
            out_specs=pl.BlockSpec((tile_rows, hidden), lambda i: (i, 0)),
        ),
        compiler_params=pltpu.CompilerParams(
            dimension_semantics=("parallel",),
            vmem_limit_bytes=32 * 1024 * 1024,
        ),
    )(x2, r)

    if rows_pad != rows:
        out = out[:rows]
    return out.reshape(orig_shape)


if __name__ == "__main__":
    key = jax.random.PRNGKey(0)
    # Small shape consistent with the module: (batch=2, seq=8, hidden=32);
    # norms / noise are taken over the last (hidden) axis.
    x = jax.random.normal(key, (2, 8, 32), dtype=jnp.float32)

    y = vector_displacement_noise(
        x, sigma=0.1, training=True, key=jax.random.PRNGKey(1234)
    )
    y = jax.block_until_ready(y)

    # Sanity checks: shape/dtype preserved, per-vector norm preserved,
    # direction actually perturbed.
    assert y.shape == x.shape and y.dtype == x.dtype
    xn = jnp.linalg.norm(x, axis=-1)
    yn = jnp.linalg.norm(y, axis=-1)
    assert jnp.allclose(xn, yn, rtol=1e-4, atol=1e-4), "norm not preserved"
    assert not jnp.allclose(x, y), "no perturbation applied"

    # Eval mode / sigma==0 is identity (handled in the wrapper, like training flag).
    y_eval = vector_displacement_noise(x, sigma=0.1, training=False)
    assert jnp.array_equal(y_eval, x)

    print("KERNEL_OK")
</pallas_src>

<mosaic_0001>
module attributes {stable_mosaic.version = 11 : i64} {
  func.func @_vdn_kernel(%arg0: i32, %arg1: memref<16x32xf32, #tpu.memory_space<vmem>>, %arg2: memref<16x32xf32, #tpu.memory_space<vmem>>, %arg3: memref<16x32xf32, #tpu.memory_space<vmem>>) attributes {dimension_semantics = [#tpu.dimension_semantics<parallel>], iteration_bounds = array<i64: 1>, scalar_prefetch = 0 : i64, scratch_operands = 0 : i64, tpu.core_type = #tpu.core_type<tc>, window_params = [{transform_indices = @transform_0, window_bounds = array<i64: 16, 32>}, {transform_indices = @transform_1, window_bounds = array<i64: 16, 32>}, {transform_indices = @transform_2, window_bounds = array<i64: 16, 32>}]} {
    %c0 = arith.constant 0 : index
    %c0_0 = arith.constant 0 : index
    %0 = vector.load %arg1[%c0, %c0_0] : memref<16x32xf32, #tpu.memory_space<vmem>>, vector<16x32xf32>
    %c0_1 = arith.constant 0 : index
    %c0_2 = arith.constant 0 : index
    %1 = vector.load %arg2[%c0_1, %c0_2] : memref<16x32xf32, #tpu.memory_space<vmem>>, vector<16x32xf32>
    %2 = arith.mulf %0, %0 : vector<16x32xf32>
    %cst = arith.constant dense<0.000000e+00> : vector<16xf32>
    %3 = vector.multi_reduction <add>, %2, %cst [1] : vector<16x32xf32> to vector<16xf32>
    %4 = vector.shape_cast %3 : vector<16xf32> to vector<16x1xf32>
    %5 = math.sqrt %4 : vector<16x1xf32>
    %cst_3 = arith.constant 1.000000e-01 : f32
    %6 = vector.broadcast %cst_3 : f32 to vector<16x1xf32>
    %7 = arith.mulf %6, %5 : vector<16x1xf32>
    %8 = vector.broadcast %7 : vector<16x1xf32> to vector<16x32xf32>
    %9 = arith.mulf %8, %1 : vector<16x32xf32>
    %10 = arith.mulf %1, %1 : vector<16x32xf32>
    %cst_4 = arith.constant dense<0.000000e+00> : vector<16xf32>
    %11 = vector.multi_reduction <add>, %10, %cst_4 [1] : vector<16x32xf32> to vector<16xf32>
    %12 = vector.shape_cast %11 : vector<16xf32> to vector<16x1xf32>
    %13 = math.rsqrt %12 : vector<16x1xf32>
    %14 = vector.broadcast %13 : vector<16x1xf32> to vector<16x32xf32>
    %15 = arith.mulf %9, %14 : vector<16x32xf32>
    %16 = arith.addf %0, %15 : vector<16x32xf32>
    %17 = arith.mulf %16, %16 : vector<16x32xf32>
    %cst_5 = arith.constant dense<0.000000e+00> : vector<16xf32>
    %18 = vector.multi_reduction <add>, %17, %cst_5 [1] : vector<16x32xf32> to vector<16xf32>
    %19 = vector.shape_cast %18 : vector<16xf32> to vector<16x1xf32>
    %20 = math.rsqrt %19 : vector<16x1xf32>
    %21 = arith.mulf %5, %20 : vector<16x1xf32>
    %22 = vector.broadcast %21 : vector<16x1xf32> to vector<16x32xf32>
    %23 = arith.mulf %22, %16 : vector<16x32xf32>
    %c0_6 = arith.constant 0 : index
    %c0_7 = arith.constant 0 : index
    %24 = vector.load %arg3[%c0_6, %c0_7] : memref<16x32xf32, #tpu.memory_space<vmem>>, vector<16x32xf32>
    tpu.vector_store %arg3[%c0_6, %c0_7], %23 {strides = array<i32>} : memref<16x32xf32, #tpu.memory_space<vmem>>, vector<16x32xf32>,
    return
  }
  func.func @transform_0(%arg0: i32) -> (i32, i32) {
    %c0_i32 = arith.constant 0 : i32
    %c0_i32_0 = arith.constant 0 : i32
    return %arg0, %c0_i32 : i32, i32
  }
  func.func @transform_1(%arg0: i32) -> (i32, i32) {
    %c0_i32 = arith.constant 0 : i32
    %c0_i32_0 = arith.constant 0 : i32
    return %arg0, %c0_i32 : i32, i32
  }
  func.func @transform_2(%arg0: i32) -> (i32, i32) {
    %c0_i32 = arith.constant 0 : i32
    %c0_i32_0 = arith.constant 0 : i32
    return %arg0, %c0_i32 : i32, i32
  }
}

</mosaic_0001>

<llo_original>
// kernel: tpu_custom_call.1
$region0: #{tpu_custom_call.1}
  #allocation0 [shape = 'u32[]', space=smem, size = 0x4, offset = 0x4, fixed_abs, tag = 'smem constant byte address 0x4 - core index']
  #allocation1 [shape = 'u32[144,128]{1,0:T(1,128)}', space=vmem, size = 0x12000, scoped, tag = 'internal scratch']
  %s0 = inlined_call_operand.hbm [shape: f32[16,32], index: 0, kind: input, shape index: {}]
  %s1 = inlined_call_operand.hbm [shape: f32[16,32], index: 1, kind: input, shape index: {}]
  %s2 = inlined_call_operand.hbm [shape: f32[16,32], index: 2, kind: output, shape index: {}]
  %s3 = sld [smem:[#allocation0]]
  $region26: #{tpu_custom_call.1} parent=0
    _
  %s5 = ssub.s32 1, %s3
  %s6 = scalar_select 0, %s5, %s3
  $region1: #{tpu_custom_call.1} parent=0
    #allocation2 [shape = 'u8[8192]{0}', space=vmem, size = 0x2000, scoped, tag = 'input window, operand 0, single buffered']
    #allocation3 [shape = 's32[1]{0}', space=sflag, size = 0x4, scoped, tag = 'scoped memory for tpu_custom_call.1']
    #allocation4 [shape = 's32[1]{0}', space=sflag, size = 0x4, scoped, tag = 'scoped memory for tpu_custom_call.1']
    #allocation5 [shape = 'u8[8192]{0}', space=vmem, size = 0x2000, scoped, tag = 'input window, operand 1, single buffered']
    #allocation6 [shape = 's32[1]{0}', space=sflag, size = 0x4, scoped, tag = 'scoped memory for tpu_custom_call.1']
    #allocation7 [shape = 'u8[8192]{0}', space=vmem, size = 0x2000, scoped, tag = 'output window, operand 0, single buffered']
    %7 = vsyncpa [#allocation3], 0
    %8 = vsyncpa [#allocation6], 0
    %9 = vsyncpa [#allocation4], 0
    // Predicated region
    $region2: #{tpu_custom_call.1} parent=1 // pred_check
      _
    $region3: #{tpu_custom_call.1} parent=1 // pred_check_branch
      %11 = sbr.rel (0) target = $region5
    $region4: #{tpu_custom_call.1} parent=1 // pred_region
      %s13 = ssub.s32 256, 256
      %14 = vsyncadd [#allocation3], %s13
      %s15 = sshll.u32 [#allocation2], 4
      %s16 = int_to_ptr.vmem [resolvable:$true] %s15
      %21 = dma.hbm_to_vmem [thread:$0]  %s0, 256, %s16, [#allocation3], 128, 128, 8
    $region5: #{tpu_custom_call.1} parent=1 // pred_fallthru
      _
    // Predicated region
    $region6: #{tpu_custom_call.1} parent=1 // pred_check
      _
    $region7: #{tpu_custom_call.1} parent=1 // pred_check_branch
      %23 = sbr.rel (0) target = $region9
    $region8: #{tpu_custom_call.1} parent=1 // pred_region
      %s25 = ssub.s32 256, 256
      %26 = vsyncadd [#allocation6], %s25
      %s27 = sshll.u32 [#allocation5], 4
      %s28 = int_to_ptr.vmem [resolvable:$true] %s27
      %33 = dma.hbm_to_vmem [thread:$0]  %s1, 256, %s28, [#allocation6], 128, 128, 8
    $region9: #{tpu_custom_call.1} parent=1 // pred_fallthru
      _
    // Predicated region
    $region10: #{tpu_custom_call.1} parent=1 // pred_check
      _
    $region11: #{tpu_custom_call.1} parent=1 // pred_check_branch
      %35 = sbr.rel (0) target = $region13
    $region12: #{tpu_custom_call.1} parent=1 // pred_region
      %36 = dma.done [#allocation3], 256
    $region13: #{tpu_custom_call.1} parent=1 // pred_fallthru
      _
    // Predicated region
    $region14: #{tpu_custom_call.1} parent=1 // pred_check
      _
    $region15: #{tpu_custom_call.1} parent=1 // pred_check_branch
      %38 = sbr.rel (0) target = $region17
    $region16: #{tpu_custom_call.1} parent=1 // pred_region
      %39 = dma.done [#allocation6], 256
    $region17: #{tpu_custom_call.1} parent=1 // pred_fallthru
      _
    %v40 = vld [vmem:[#allocation2] sm:$0xff]
    %v41 = vld [vmem:[#allocation2 + $0x8] sm:$0xff]
    %v42 = vld [vmem:[#allocation5] sm:$0xff]
    %v43 = vld [vmem:[#allocation5 + $0x8] sm:$0xff]
    %v44 = vmul.f32 %v40, %v40
    %v45 = vmul.f32 %v41, %v41
    %vm46 = vcmask 261120
    %v47 = vsel %vm46, %v44, 0.0
    %48 = vadd.xlane.f32.xlu0 %v47
    %v49 = vpop.xlane.xlu0 %48
    %v50 = vsel %vm46, %v45, 0.0
    %51 = vadd.xlane.f32.xlu0 %v50
    %v52 = vpop.xlane.xlu0 %51
    %v53 = vrsqrt.pop %v49
    %v54 = vmul.f32 %v49, %v53
    %vm55 = vcmp.eq.f32.partialorder %v49, inf
    %v56 = vsel %vm55, %v49, %v54
    %vm57 = vcmp.eq.f32.partialorder %v49, 0.0
    %v58 = vand.u32 %v49, 2147483648
    %v59 = vsel %vm57, %v58, %v56
    %v60 = vrsqrt.pop %v52
    %v61 = vmul.f32 %v52, %v60
    %vm62 = vcmp.eq.f32.partialorder %v52, inf
    %v63 = vsel %vm62, %v52, %v61
    %vm64 = vcmp.eq.f32.partialorder %v52, 0.0
    %v65 = vand.u32 %v52, 2147483648
    %v66 = vsel %vm64, %v65, %v63
    %v67 = vmul.f32 %v59, 0.1
    %v68 = vmul.f32 %v66, 0.1
    %v69 = vmul.f32 %v67, %v42
    %v70 = vmul.f32 %v68, %v43
    %v71 = vmul.f32 %v42, %v42
    %v72 = vmul.f32 %v43, %v43
    %v73 = vsel %vm46, %v71, 0.0
    %74 = vadd.xlane.f32.xlu0 %v73
    %v75 = vpop.xlane.xlu0 %74
    %v76 = vsel %vm46, %v72, 0.0
    %77 = vadd.xlane.f32.xlu0 %v76
    %v78 = vpop.xlane.xlu0 %77
    %v79 = vrsqrt.pop %v75
    %v80 = vrsqrt.pop %v78
    %v81 = vmul.f32 %v69, %v79
    %v82 = vmul.f32 %v70, %v80
    %v83 = vadd.f32 %v40, %v81
    %v84 = vadd.f32 %v41, %v82
    %v85 = vmul.f32 %v83, %v83
    %v86 = vmul.f32 %v84, %v84
    %v87 = vsel %vm46, %v85, 0.0
    %88 = vadd.xlane.f32.xlu0 %v87
    %v89 = vpop.xlane.xlu0 %88
    %v90 = vsel %vm46, %v86, 0.0
    %91 = vadd.xlane.f32.xlu0 %v90
    %v92 = vpop.xlane.xlu0 %91
    %v93 = vrsqrt.pop %v89
    %v94 = vrsqrt.pop %v92
    %v95 = vmul.f32 %v59, %v93
    %v96 = vmul.f32 %v66, %v94
    %v97 = vmul.f32 %v95, %v83
    %v98 = vmul.f32 %v96, %v84
    %99 = vst.msk [vmem:[#allocation7] sm:$0xff] %vm46, %v97
    %100 = vst.msk [vmem:[#allocation7 + $0x8] sm:$0xff] %vm46, %v98
    // Predicated region
    $region18: #{tpu_custom_call.1} parent=1 // pred_check
      _
    $region19: #{tpu_custom_call.1} parent=1 // pred_check_branch
      %102 = sbr.rel (0) target = $region21
    $region20: #{tpu_custom_call.1} parent=1 // pred_region
      %s104 = ssub.s32 256, 256
      %105 = vsyncadd [#allocation4], %s104
      %s106 = sshll.u32 [#allocation7], 4
      %s107 = int_to_ptr.vmem [resolvable:$true] %s106
      %112 = dma.vmem_to_hbm [thread:$0]  %s107, 256, %s2, [#allocation4], 128, 128, 8
    $region21: #{tpu_custom_call.1} parent=1 // pred_fallthru
      _
    // Predicated region
    $region22: #{tpu_custom_call.1} parent=1 // pred_check
      _
    $region23: #{tpu_custom_call.1} parent=1 // pred_check_branch
      %114 = sbr.rel (0) target = $region25
    $region24: #{tpu_custom_call.1} parent=1 // pred_region
      %115 = dma.done [#allocation4], 256
    $region25: #{tpu_custom_call.1} parent=1 // pred_fallthru
      _
    %116 = vsyncpa [#allocation3], 1
    %117 = vsyncpa [#allocation6], 1
    %118 = vsyncpa [#allocation4], 1

</llo_original>
